<compile_context>
chip_gen: v6e
topology: v6e:2x2x1
jax: 0.10.0
libtpu: 0.0.40
codegen_flags: <defaults>
</compile_context>

<pallas_src>
import functools
import math

import jax
import jax.numpy as jnp
from jax.experimental import pallas as pl
from jax.experimental.pallas import tpu as pltpu


def _round_up(x, m):
    return ((x + m - 1) // m) * m


# ---------------------------------------------------------------------------
# Fused linear projection: [y0|y1|...] = x @ [W0|W1|...] + [b0|b1|...]
# One MXU matmul against the concatenated weight, split into n_out outputs.
# ---------------------------------------------------------------------------
def _fused_linear_kernel(x_ref, w_ref, b_ref, *o_refs, dout):
    # Operands stay in their native dtype (bf16-friendly); accumulate in f32.
    y = jnp.dot(x_ref[...], w_ref[...], preferred_element_type=jnp.float32)
    y = y + b_ref[...].astype(jnp.float32)
    for i, o_ref in enumerate(o_refs):
        o_ref[...] = y[:, i * dout:(i + 1) * dout].astype(o_ref.dtype)


def _fused_linear(x2, w_io, b, *, n_out, tile_m=512):
    """x2: [M, Din]; w_io: [Din, n_out*Dout] (pre-transposed [in,out] layout);
    b: [n_out*Dout].  Returns a tuple of n_out arrays of shape [M, Dout]."""
    M, Din = x2.shape
    Dtot = w_io.shape[1]
    assert Dtot % n_out == 0
    Dout = Dtot // n_out

    if M <= tile_m:
        tm, Mp = M, M                       # full-extent block (exempt from 8/128 rule)
    else:
        tm = tile_m                         # 512: taller M per MXU pass, fewer grid steps
        Mp = _round_up(M, tm)
    if Mp != M:                             # ragged M: pad once in HBM
        x2 = jnp.pad(x2, ((0, Mp - M), (0, 0)))

    grid = (Mp // tm,)
    out_shapes = tuple(jax.ShapeDtypeStruct((Mp, Dout), x2.dtype) for _ in range(n_out))
    out_specs = tuple(pl.BlockSpec((tm, Dout), lambda i: (i, 0)) for _ in range(n_out))

    # NOTE: the weight/bias index maps are grid-constant, so they are DMA'd into
    # VMEM only once.  On v7x (64 MiB VMEM) with a large f32 fused QKV weight,
    # cast weights to bf16 caller-side and/or lower tile_m; v5e/v6e (128 MiB)
    # have ample headroom at BERT sizes.
    outs = pl.pallas_call(
        functools.partial(_fused_linear_kernel, dout=Dout),
        out_shape=out_shapes,
        grid_spec=pltpu.PrefetchScalarGridSpec(
            num_scalar_prefetch=0,
            grid=grid,
            in_specs=[
                pl.BlockSpec((tm, Din), lambda i: (i, 0)),     # activation tile
                pl.BlockSpec((Din, Dtot), lambda i: (0, 0)),   # fused weight (resident)
                pl.BlockSpec((1, Dtot), lambda i: (0, 0)),     # fused bias
            ],
            out_specs=out_specs,
        ),
        compiler_params=pltpu.CompilerParams(
            dimension_semantics=("parallel",)),
    )(x2, w_io, b.reshape(1, Dtot))

    if Mp != M:
        outs = tuple(o[:M] for o in outs)
    return outs


# ---------------------------------------------------------------------------
# Multi-head attention core.  Q/K/V stay in (N, L, D) layout; the whole key /
# value context for one batch element is resident in VMEM, so there is no kv
# grid axis and no online-softmax rescale.  Heads are handled with static lane
# slices inside the kernel, and the output tile is the full lane-dense
# (bq, D) block.
# ---------------------------------------------------------------------------
def _mha_kernel(q_ref, k_ref, v_ref, mask_ref, o_ref, *, scale, num_heads, head_dim):
    # q_ref: (bq, D); k_ref, v_ref: (Lk, D); mask_ref: (1, Lk) additive mask.
    mask = mask_ref[...].astype(jnp.float32)                      # (1, Lk)
    for h in range(num_heads):                                    # static, unrolled
        sl = slice(h * head_dim, (h + 1) * head_dim)
        qh = q_ref[:, sl] * scale                                 # scale folded into Q
        kh = k_ref[:, sl]                                         # (Lk, dh)
        vh = v_ref[:, sl]
        # scores = (q*scale) @ k^T + mask ; contract on dh without transposing k.
        s = jax.lax.dot_general(qh, kh, (((1,), (1,)), ((), ())),
                                preferred_element_type=jnp.float32)   # (bq, Lk)
        s = s + mask
        m = jnp.max(s, axis=-1, keepdims=True)
        p = jnp.exp(s - m)                                        # f32 softmax math
        l = jnp.sum(p, axis=-1, keepdims=True)
        # TODO(synk): attention-prob dropout elided (inference mode); training
        # parity would mask `p` here via pltpu.prng_seed + pltpu.prng_random_bits.
        ctx = jnp.dot(p.astype(vh.dtype), vh, preferred_element_type=jnp.float32)
        o_ref[:, sl] = (ctx * pl.reciprocal(l, approx=True)).astype(o_ref.dtype)


def _multi_head_attention(q, k, v, mask_add, *, scale, num_heads, tile_q=512):
    """q: (N, Lq, D); k, v: (N, Lk, D); mask_add: (N, 1, Lk) f32 additive mask."""
    N, Lq, D = q.shape
    Lk = k.shape[1]
    assert D % num_heads == 0
    dh = D // num_heads

    if Lq <= tile_q:
        bq, Lqp = Lq, Lq
    else:
        bq = tile_q
        Lqp = _round_up(Lq, bq)
    if Lqp != Lq:
        q = jnp.pad(q, ((0, 0), (0, Lqp - Lq), (0, 0)))

    # TODO(synk): for very long contexts (Lk >> 1k) reinstate a kv-blocked
    # online-softmax loop; BERT-scale Lk (<= 512-1024) keeps K/V fully resident.
    grid = (N, Lqp // bq)

    out = pl.pallas_call(
        functools.partial(_mha_kernel, scale=scale, num_heads=num_heads, head_dim=dh),
        out_shape=jax.ShapeDtypeStruct((N, Lqp, D), q.dtype),
        grid_spec=pltpu.PrefetchScalarGridSpec(
            num_scalar_prefetch=0,
            grid=grid,
            in_specs=[
                pl.BlockSpec((None, bq, D), lambda b, qi: (b, qi, 0)),   # Q tile
                pl.BlockSpec((None, Lk, D), lambda b, qi: (b, 0, 0)),    # K (resident per b)
                pl.BlockSpec((None, Lk, D), lambda b, qi: (b, 0, 0)),    # V (resident per b)
                pl.BlockSpec((None, 1, Lk), lambda b, qi: (b, 0, 0)),    # additive mask
            ],
            out_specs=pl.BlockSpec((None, bq, D), lambda b, qi: (b, qi, 0)),
        ),
        compiler_params=pltpu.CompilerParams(
            dimension_semantics=("parallel", "parallel")),
    )(q, k, v, mask_add)

    return out[:, :Lq, :]


# ---------------------------------------------------------------------------
# Full BertSelfAttention forward (eval mode)
# ---------------------------------------------------------------------------
def bert_self_attention(query_states, key_states, value_states, attention_mask,
                        params, *, num_heads, tile_m=512, tile_q=512):
    """query_states: (N, Lq, D); key/value_states: (N, Lk, D);
    attention_mask: (N, 1, Lk) with 1 = keep, 0 = masked.
    params: dict with 'wq','bq','wk','bk','wv','bv'; weights are [in, out]
    (transposed ONCE from PyTorch's nn.Linear [out, in] layout at prep time)."""
    N, Lq, D = query_states.shape
    Lk = key_states.shape[1]
    assert D % num_heads == 0
    scale = 1.0 / math.sqrt(D // num_heads)

    wq, wk, wv = params["wq"], params["wk"], params["wv"]
    bq_, bk_, bv_ = params["bq"], params["bk"], params["bv"]

    # Fused projections: read the activation from HBM once when inputs alias.
    # (In production the concatenated weights/biases would be built once at
    # parameter-prep time, not per forward.)
    if query_states is key_states and key_states is value_states:
        w = jnp.concatenate([wq, wk, wv], axis=1)
        b = jnp.concatenate([bq_, bk_, bv_])
        q, k, v = _fused_linear(query_states.reshape(N * Lq, D), w, b,
                                n_out=3, tile_m=tile_m)
    elif key_states is value_states:
        (q,) = _fused_linear(query_states.reshape(N * Lq, D), wq, bq_,
                             n_out=1, tile_m=tile_m)
        k, v = _fused_linear(key_states.reshape(N * Lk, D),
                             jnp.concatenate([wk, wv], axis=1),
                             jnp.concatenate([bk_, bv_]),
                             n_out=2, tile_m=tile_m)
    else:
        (q,) = _fused_linear(query_states.reshape(N * Lq, D), wq, bq_,
                             n_out=1, tile_m=tile_m)
        (k,) = _fused_linear(key_states.reshape(N * Lk, D), wk, bk_,
                             n_out=1, tile_m=tile_m)
        (v,) = _fused_linear(value_states.reshape(N * Lk, D), wv, bv_,
                             n_out=1, tile_m=tile_m)

    # No head transposes: keep (N, L, D); heads are sliced inside the kernel.
    q = q.reshape(N, Lq, D)
    k = k.reshape(N, Lk, D)
    v = v.reshape(N, Lk, D)

    # (1 - mask) * -10000, broadcast over heads and query positions.
    mask_add = (1.0 - attention_mask.astype(jnp.float32)) * -10000.0  # (N, 1, Lk)

    return _multi_head_attention(q, k, v, mask_add, scale=scale,
                                 num_heads=num_heads, tile_q=tile_q)   # (N, Lq, D)


# ---------------------------------------------------------------------------
# Pure-JAX reference for correctness checking
# ---------------------------------------------------------------------------
def _reference(query_states, key_states, value_states, attention_mask, params,
               num_heads):
    N, Lq, D = query_states.shape
    Lk = key_states.shape[1]
    dh = D // num_heads

    q = query_states @ params["wq"] + params["bq"]
    k = key_states @ params["wk"] + params["bk"]
    v = value_states @ params["wv"] + params["bv"]

    def split(x, L):
        return x.reshape(N, L, num_heads, dh).transpose(0, 2, 1, 3)

    qh, kh, vh = split(q, Lq), split(k, Lk), split(v, Lk)
    mask = (1.0 - attention_mask[:, None, :, :].astype(jnp.float32)) * -10000.0
    s = jnp.einsum("bhqd,bhkd->bhqk", qh, kh) / math.sqrt(dh) + mask
    p = jax.nn.softmax(s, axis=-1)
    ctx = jnp.einsum("bhqk,bhkd->bhqd", p, vh)
    return ctx.transpose(0, 2, 1, 3).reshape(N, Lq, D)


if __name__ == "__main__":
    N, Lq, Lk, D, num_heads = 2, 8, 8, 32, 4

    key = jax.random.PRNGKey(0)
    ks = jax.random.split(key, 9)

    query_states = jax.random.normal(ks[0], (N, Lq, D), dtype=jnp.float32)
    key_states = jax.random.normal(ks[1], (N, Lk, D), dtype=jnp.float32)
    value_states = jax.random.normal(ks[2], (N, Lk, D), dtype=jnp.float32)

    # attention_mask (N, 1, Lk): 1 = attend, 0 = masked; mask the last two key
    # positions of batch 1 to exercise the masking path.
    attention_mask = jnp.ones((N, 1, Lk), dtype=jnp.float32)
    attention_mask = attention_mask.at[1, 0, Lk - 2:].set(0.0)

    # Parameter prep: PyTorch nn.Linear stores [out, in]; transpose once here
    # (not per forward call) so the kernels see [in, out].
    def make_linear(kw, kb):
        w_oi = jax.random.normal(kw, (D, D), dtype=jnp.float32) * 0.05
        b = jax.random.normal(kb, (D,), dtype=jnp.float32) * 0.05
        return jnp.asarray(w_oi.T), b

    wq, bq = make_linear(ks[3], ks[4])
    wk, bk = make_linear(ks[5], ks[6])
    wv, bv = make_linear(ks[7], ks[8])
    params = dict(wq=wq, bq=bq, wk=wk, bk=bk, wv=wv, bv=bv)

    def check(qs, kst, vst):
        out = bert_self_attention(qs, kst, vst, attention_mask, params,
                                  num_heads=num_heads)
        out = jax.block_until_ready(out)
        ref = _reference(qs, kst, vst, attention_mask, params, num_heads)
        assert out.shape == ref.shape
        err = float(jnp.max(jnp.abs(out - ref)))
        assert jnp.allclose(out, ref, atol=2e-3, rtol=2e-3), f"mismatch: {err}"

    # 1) true self-attention (fused QKV projection path)
    check(query_states, query_states, query_states)
    # 2) cross-attention with shared key/value source (Q + fused-KV path)
    check(query_states, key_states, key_states)
    # 3) fully distinct inputs (separate projection path)
    check(query_states, key_states, value_states)

    print("KERNEL_OK")
</pallas_src>

<mosaic_0001>
module attributes {stable_mosaic.version = 11 : i64} {
  func.func @_fused_linear_kernel(%arg0: i32, %arg1: memref<16x32xf32, #tpu.memory_space<vmem>>, %arg2: memref<32x96xf32, #tpu.memory_space<vmem>>, %arg3: memref<1x96xf32, #tpu.memory_space<vmem>>, %arg4: memref<16x32xf32, #tpu.memory_space<vmem>>, %arg5: memref<16x32xf32, #tpu.memory_space<vmem>>, %arg6: memref<16x32xf32, #tpu.memory_space<vmem>>) attributes {dimension_semantics = [#tpu.dimension_semantics<parallel>], iteration_bounds = array<i64: 1>, scalar_prefetch = 0 : i64, scratch_operands = 0 : i64, tpu.core_type = #tpu.core_type<tc>, window_params = [{transform_indices = @transform_0, window_bounds = array<i64: 16, 32>}, {pipeline_mode = #tpu.pipeline_mode<synchronous>, transform_indices = @transform_1, window_bounds = array<i64: 32, 96>}, {pipeline_mode = #tpu.pipeline_mode<synchronous>, transform_indices = @transform_2, window_bounds = array<i64: 1, 96>}, {transform_indices = @transform_3, window_bounds = array<i64: 16, 32>}, {transform_indices = @transform_4, window_bounds = array<i64: 16, 32>}, {transform_indices = @transform_5, window_bounds = array<i64: 16, 32>}]} {
    %c0 = arith.constant 0 : index
    %c0_0 = arith.constant 0 : index
    %0 = vector.load %arg1[%c0, %c0_0] : memref<16x32xf32, #tpu.memory_space<vmem>>, vector<16x32xf32>
    %c0_1 = arith.constant 0 : index
    %c0_2 = arith.constant 0 : index
    %1 = vector.load %arg2[%c0_1, %c0_2] : memref<32x96xf32, #tpu.memory_space<vmem>>, vector<32x96xf32>
    %cst = arith.constant dense<0.000000e+00> : vector<16x96xf32>
    %2 = tpu.matmul %0, %1, %cst {dimension_numbers = #tpu.dot_dimension_numbers<[1], [0], [0], [1], [0, 0, 1, 1], [], []>} : vector<16x32xf32>, vector<32x96xf32>, vector<16x96xf32> -> vector<16x96xf32>
    %c0_3 = arith.constant 0 : index
    %c0_4 = arith.constant 0 : index
    %3 = vector.load %arg3[%c0_3, %c0_4] : memref<1x96xf32, #tpu.memory_space<vmem>>, vector<1x96xf32>
    %4 = vector.broadcast %3 : vector<1x96xf32> to vector<16x96xf32>
    %5 = arith.addf %2, %4 : vector<16x96xf32>
    %6 = vector.extract_strided_slice %5 {offsets = [0, 0], sizes = [16, 32], strides = [1, 1]} : vector<16x96xf32> to vector<16x32xf32>
    %c0_5 = arith.constant 0 : index
    %c0_6 = arith.constant 0 : index
    %7 = vector.load %arg4[%c0_5, %c0_6] : memref<16x32xf32, #tpu.memory_space<vmem>>, vector<16x32xf32>
    tpu.vector_store %arg4[%c0_5, %c0_6], %6 {strides = array<i32>} : memref<16x32xf32, #tpu.memory_space<vmem>>, vector<16x32xf32>,
    %8 = vector.extract_strided_slice %5 {offsets = [0, 32], sizes = [16, 32], strides = [1, 1]} : vector<16x96xf32> to vector<16x32xf32>
    %c0_7 = arith.constant 0 : index
    %c0_8 = arith.constant 0 : index
    %9 = vector.load %arg5[%c0_7, %c0_8] : memref<16x32xf32, #tpu.memory_space<vmem>>, vector<16x32xf32>
    tpu.vector_store %arg5[%c0_7, %c0_8], %8 {strides = array<i32>} : memref<16x32xf32, #tpu.memory_space<vmem>>, vector<16x32xf32>,
    %10 = vector.extract_strided_slice %5 {offsets = [0, 64], sizes = [16, 32], strides = [1, 1]} : vector<16x96xf32> to vector<16x32xf32>
    %c0_9 = arith.constant 0 : index
    %c0_10 = arith.constant 0 : index
    %11 = vector.load %arg6[%c0_9, %c0_10] : memref<16x32xf32, #tpu.memory_space<vmem>>, vector<16x32xf32>
    tpu.vector_store %arg6[%c0_9, %c0_10], %10 {strides = array<i32>} : memref<16x32xf32, #tpu.memory_space<vmem>>, vector<16x32xf32>,
    return
  }
  func.func @transform_0(%arg0: i32) -> (i32, i32) {
    %c0_i32 = arith.constant 0 : i32
    %c0_i32_0 = arith.constant 0 : i32
    return %arg0, %c0_i32 : i32, i32
  }
  func.func @transform_1(%arg0: i32) -> (i32, i32) {
    %c0_i32 = arith.constant 0 : i32
    %c0_i32_0 = arith.constant 0 : i32
    %c0_i32_1 = arith.constant 0 : i32
    return %c0_i32, %c0_i32_0 : i32, i32
  }
  func.func @transform_2(%arg0: i32) -> (i32, i32) {
    %c0_i32 = arith.constant 0 : i32
    %c0_i32_0 = arith.constant 0 : i32
    %c0_i32_1 = arith.constant 0 : i32
    return %c0_i32, %c0_i32_0 : i32, i32
  }
  func.func @transform_3(%arg0: i32) -> (i32, i32) {
    %c0_i32 = arith.constant 0 : i32
    %c0_i32_0 = arith.constant 0 : i32
    return %arg0, %c0_i32 : i32, i32
  }
  func.func @transform_4(%arg0: i32) -> (i32, i32) {
    %c0_i32 = arith.constant 0 : i32
    %c0_i32_0 = arith.constant 0 : i32
    return %arg0, %c0_i32 : i32, i32
  }
  func.func @transform_5(%arg0: i32) -> (i32, i32) {
    %c0_i32 = arith.constant 0 : i32
    %c0_i32_0 = arith.constant 0 : i32
    return %arg0, %c0_i32 : i32, i32
  }
}

</mosaic_0001>

<llo_original>
// kernel: tpu_custom_call.1
$region0: #{tpu_custom_call.1}
  #allocation0 [shape = 'u32[]', space=smem, size = 0x4, offset = 0x4, fixed_abs, tag = 'smem constant byte address 0x4 - core index']
  #allocation1 [shape = 'u32[144,128]{1,0:T(1,128)}', space=vmem, size = 0x12000, scoped, tag = 'internal scratch']
  %s0 = inlined_call_operand.hbm [shape: f32[16,32], index: 0, kind: input, shape index: {}]
  %s1 = inlined_call_operand.hbm [shape: f32[32,96], index: 1, kind: input, shape index: {}]
  %s2 = inlined_call_operand.vmem [shape: f32[1,96], index: 2, kind: input, shape index: {}]
  %s3 = inlined_call_operand.hbm [shape: f32[16,32], index: 3, kind: output, shape index: {0}]
  %s4 = inlined_call_operand.hbm [shape: f32[16,32], index: 4, kind: output, shape index: {1}]
  %s5 = inlined_call_operand.hbm [shape: f32[16,32], index: 5, kind: output, shape index: {2}]
  %6 = xla_tuple %s3, %s4, %s5
  %s7 = sld [smem:[#allocation0]]
  $region46: #{tpu_custom_call.1} parent=0
    _
  %s9 = ssub.s32 1, %s7
  %s10 = scalar_select 0, %s9, %s7
  $region1: #{tpu_custom_call.1} parent=0
    #allocation2 [shape = 'u8[8192]{0}', space=vmem, size = 0x2000, scoped, tag = 'input window, operand 0, single buffered']
    #allocation3 [shape = 's32[1]{0}', space=sflag, size = 0x4, scoped, tag = 'scoped memory for tpu_custom_call.1']
    #allocation4 [shape = 's32[1]{0}', space=sflag, size = 0x4, scoped, tag = 'scoped memory for tpu_custom_call.1']
    #allocation5 [shape = 'u8[16384]{0}', space=vmem, size = 0x4000, scoped, tag = 'input window, operand 1, single buffered']
    #allocation6 [shape = 's32[1]{0}', space=sflag, size = 0x4, scoped, tag = 'scoped memory for tpu_custom_call.1']
    #allocation7 [shape = 'u8[8192]{0}', space=vmem, size = 0x2000, scoped, tag = 'output window, operand 0, single buffered']
    #allocation8 [shape = 'u8[8192]{0}', space=vmem, size = 0x2000, scoped, tag = 'output window, operand 1, single buffered']
    #allocation9 [shape = 's32[1]{0}', space=sflag, size = 0x4, scoped, tag = 'scoped memory for tpu_custom_call.1']
    #allocation10 [shape = 'u8[8192]{0}', space=vmem, size = 0x2000, scoped, tag = 'output window, operand 2, single buffered']
    %11 = vsyncpa [#allocation3], 0
    %12 = vsyncpa [#allocation6], 0
    %13 = vsyncpa [#allocation4], 0
    %14 = vsyncpa [#allocation9], 0
    // Predicated region
    $region2: #{tpu_custom_call.1} parent=1 // pred_check
      _
    $region3: #{tpu_custom_call.1} parent=1 // pred_check_branch
      %16 = sbr.rel (0) target = $region5
    $region4: #{tpu_custom_call.1} parent=1 // pred_region
      %s18 = ssub.s32 256, 256
      %19 = vsyncadd [#allocation3], %s18
      %s20 = sshll.u32 [#allocation2], 4
      %s21 = int_to_ptr.vmem [resolvable:$true] %s20
      %26 = dma.hbm_to_vmem [thread:$0]  %s0, 256, %s21, [#allocation3], 128, 128, 8
    $region5: #{tpu_custom_call.1} parent=1 // pred_fallthru
      _
    // Predicated region
    $region6: #{tpu_custom_call.1} parent=1 // pred_check
      _
    $region7: #{tpu_custom_call.1} parent=1 // pred_check_branch
      %28 = sbr.rel (0) target = $region9
    $region8: #{tpu_custom_call.1} parent=1 // pred_region
      %s30 = ssub.s32 512, 512
      %31 = vsyncadd [#allocation6], %s30
      %s32 = sshll.u32 [#allocation5], 4
      %s33 = int_to_ptr.vmem [resolvable:$true] %s32
      %38 = dma.hbm_to_vmem [thread:$0]  %s1, 512, %s33, [#allocation6], 128, 128, 8
    $region9: #{tpu_custom_call.1} parent=1 // pred_fallthru
      _
    // Predicated region
    $region10: #{tpu_custom_call.1} parent=1 // pred_check
      _
    $region11: #{tpu_custom_call.1} parent=1 // pred_check_branch
      %40 = sbr.rel (0) target = $region13
    $region12: #{tpu_custom_call.1} parent=1 // pred_region
      _
    $region13: #{tpu_custom_call.1} parent=1 // pred_fallthru
      _
    // Predicated region
    $region14: #{tpu_custom_call.1} parent=1 // pred_check
      _
    $region15: #{tpu_custom_call.1} parent=1 // pred_check_branch
      %42 = sbr.rel (0) target = $region17
    $region16: #{tpu_custom_call.1} parent=1 // pred_region
      %43 = dma.done [#allocation3], 256
    $region17: #{tpu_custom_call.1} parent=1 // pred_fallthru
      _
    // Predicated region
    $region18: #{tpu_custom_call.1} parent=1 // pred_check
      _
    $region19: #{tpu_custom_call.1} parent=1 // pred_check_branch
      %45 = sbr.rel (0) target = $region21
    $region20: #{tpu_custom_call.1} parent=1 // pred_region
      %46 = dma.done [#allocation6], 512
    $region21: #{tpu_custom_call.1} parent=1 // pred_fallthru
      _
    %v47 = vld [vmem:[#allocation2] sm:$0xff]
    %v48 = vld [vmem:[#allocation2 + $0x8] sm:$0xff]
    %v49 = vld [vmem:[#allocation5] sm:$0xff]
    %v50 = vld [vmem:[#allocation5 + $0x8] sm:$0xff]
    %v51 = vld [vmem:[#allocation5 + $0x10] sm:$0xff]
    %v52 = vld [vmem:[#allocation5 + $0x18] sm:$0xff]
    %v53 = vld [vmem:[%s2] sm:$0x1]
    %v55 = vlaneseq
    %v56 = vshrl.u32 %v55, 7
    %v57 = vsub.s32 0, %v56
    %v58 = vrot.slane %v53, %v57
    %vm60 = vcmask 261120
    %v62 = vsel %vm60, %v47, 0
    %v65 = vsel %vm60, %v48, 0
    %67 = vmatprep.subr.mxu0 0.0
    %68 = vmatpush1.msra.mxu0 0.0
    %69 = vmatprep.subr.mxu0 0.0
    %70 = vmatpush1.msra.mxu0 0.0
    %71 = vmatprep.subr.mxu0 0.0
    %72 = vmatpush1.msra.mxu0 0.0
    %73 = vmatprep.subr.mxu0 0.0
    %74 = vmatpush1.msra.mxu0 0.0
    %75 = vmatprep.subr.mxu0 0.0
    %76 = vmatpush1.msra.mxu0 0.0
    %77 = vmatprep.subr.mxu0 0.0
    %78 = vmatpush1.msra.mxu0 0.0
    %79 = vmatprep.subr.mxu0 0.0
    %80 = vmatpush1.msra.mxu0 0.0
    %81 = vmatprep.subr.mxu0 0.0
    %82 = vmatpush1.msra.mxu0 0.0
    %83 = vmatprep.subr.mxu0 0.0
    %84 = vmatpush1.msra.mxu0 0.0
    %85 = vmatprep.subr.mxu0 0.0
    %86 = vmatpush1.msra.mxu0 0.0
    %87 = vmatprep.subr.mxu0 0.0
    %88 = vmatpush1.msra.mxu0 0.0
    %89 = vmatprep.subr.mxu0 0.0
    %90 = vmatpush1.msra.mxu0 0.0
    %91 = vmatprep.subr.mxu0 0.0
    %92 = vmatpush1.msra.mxu0 %v52
    %93 = vmatprep.subr.mxu0 0.0
    %94 = vmatpush1.msra.mxu0 %v51
    %95 = vmatprep.subr.mxu0 0.0
    %96 = vmatpush1.msra.mxu0 %v50
    %97 = vmatprep.subr.mxu0 0.0
    %98 = vmatpush1.msra.mxu0 %v49
    %99 = vmatprep.subr.mxu0 0.0
    %100 = vmatpush2.msra.mxu0 0.0
    %101 = vmatprep.subr.mxu0 0.0
    %102 = vmatpush2.msra.mxu0 0.0
    %103 = vmatprep.subr.mxu0 0.0
    %104 = vmatpush2.msra.mxu0 0.0
    %105 = vmatprep.subr.mxu0 0.0
    %106 = vmatpush2.msra.mxu0 0.0
    %107 = vmatprep.subr.mxu0 0.0
    %108 = vmatpush2.msra.mxu0 0.0
    %109 = vmatprep.subr.mxu0 0.0
    %110 = vmatpush2.msra.mxu0 0.0
    %111 = vmatprep.subr.mxu0 0.0
    %112 = vmatpush2.msra.mxu0 0.0
    %113 = vmatprep.subr.mxu0 0.0
    %114 = vmatpush2.msra.mxu0 0.0
    %115 = vmatprep.subr.mxu0 0.0
    %116 = vmatpush2.msra.mxu0 0.0
    %117 = vmatprep.subr.mxu0 0.0
    %118 = vmatpush2.msra.mxu0 0.0
    %119 = vmatprep.subr.mxu0 0.0
    %120 = vmatpush2.msra.mxu0 0.0
    %121 = vmatprep.subr.mxu0 0.0
    %122 = vmatpush2.msra.mxu0 0.0
    %123 = vmatprep.subr.mxu0 0.0
    %124 = vmatpush2.msra.mxu0 0.0
    %125 = vmatprep.subr.mxu0 0.0
    %126 = vmatpush2.msra.mxu0 0.0
    %127 = vmatprep.subr.mxu0 0.0
    %128 = vmatpush2.msra.mxu0 0.0
    %129 = vmatprep.subr.mxu0 0.0
    %130 = vmatpush2.msra.mxu0 0.0
    %131 = vmatprep.mubr.f32.mxu0 0.0
    %132 = vmatmul.mubr.f32.gmra.mxu0 %v62
    %v133 = vpop.f32.mrf.mxu0
    %v134 = vadd.f32 %v58, %v133
    %v135 = vpop.f32.mrf.mxu0
    %136 = vmatprep.mubr.f32.mxu0 0.0
    %137 = vmatmul.mubr.f32.gmra.mxu0 %v65
    %v138 = vpop.f32.mrf.mxu0
    %v139 = vadd.f32 %v58, %v138
    %v140 = vpop.f32.mrf.mxu0
    %141 = vdwg.mxu0
    %142 = vst.msk [vmem:[#allocation7] sm:$0xff] %vm60, %v134
    %143 = vst.msk [vmem:[#allocation7 + $0x8] sm:$0xff] %vm60, %v139
    %146 = vrot.lane.b32.xlu0 %v134, 96
    %v147 = vpop.permute.xlu0 %146
    %148 = vrot.lane.b32.xlu0 %v139, 96
    %v149 = vpop.permute.xlu0 %148
    %152 = vst.msk [vmem:[#allocation8] sm:$0xff] %vm60, %v147
    %153 = vst.msk [vmem:[#allocation8 + $0x8] sm:$0xff] %vm60, %v149
    %154 = vrot.lane.b32.xlu0 %v134, 64
    %v155 = vpop.permute.xlu0 %154
    %156 = vrot.lane.b32.xlu0 %v139, 64
    %v157 = vpop.permute.xlu0 %156
    %160 = vst.msk [vmem:[#allocation10] sm:$0xff] %vm60, %v155
    %161 = vst.msk [vmem:[#allocation10 + $0x8] sm:$0xff] %vm60, %v157
    // Predicated region
    $region22: #{tpu_custom_call.1} parent=1 // pred_check
      _
    $region23: #{tpu_custom_call.1} parent=1 // pred_check_branch
      %163 = sbr.rel (0) target = $region25
    $region24: #{tpu_custom_call.1} parent=1 // pred_region
      %s165 = ssub.s32 256, 256
      %166 = vsyncadd [#allocation4], %s165
      %s167 = sshll.u32 [#allocation7], 4
      %s168 = int_to_ptr.vmem [resolvable:$true] %s167
      %173 = dma.vmem_to_hbm [thread:$0]  %s168, 256, %s3, [#allocation4], 128, 128, 8
    $region25: #{tpu_custom_call.1} parent=1 // pred_fallthru
      _
    // Predicated region
    $region26: #{tpu_custom_call.1} parent=1 // pred_check
      _
    $region27: #{tpu_custom_call.1} parent=1 // pred_check_branch
      %175 = sbr.rel (0) target = $region29
    $region28: #{tpu_custom_call.1} parent=1 // pred_region
      %s177 = ssub.s32 256, 256
      %178 = vsyncadd [#allocation9], %s177
      %s179 = sshll.u32 [#allocation8], 4
      %s180 = int_to_ptr.vmem [resolvable:$true] %s179
      %185 = dma.vmem_to_hbm [thread:$0]  %s180, 256, %s4, [#allocation9], 128, 128, 8
    $region29: #{tpu_custom_call.1} parent=1 // pred_fallthru
      _
    // Predicated region
    $region30: #{tpu_custom_call.1} parent=1 // pred_check
      _
    $region31: #{tpu_custom_call.1} parent=1 // pred_check_branch
      %187 = sbr.rel (0) target = $region33
    $region32: #{tpu_custom_call.1} parent=1 // pred_region
      %s189 = ssub.s32 256, 256
      %190 = vsyncadd [#allocation9], %s189
      %s191 = sshll.u32 [#allocation10], 4
      %s192 = int_to_ptr.vmem [resolvable:$true] %s191
      %197 = dma.vmem_to_hbm [thread:$0]  %s192, 256, %s5, [#allocation9], 128, 128, 8
    $region33: #{tpu_custom_call.1} parent=1 // pred_fallthru
      _
    // Predicated region
    $region34: #{tpu_custom_call.1} parent=1 // pred_check
      _
    $region35: #{tpu_custom_call.1} parent=1 // pred_check_branch
      %199 = sbr.rel (0) target = $region37
    $region36: #{tpu_custom_call.1} parent=1 // pred_region
      %200 = dma.done [#allocation4], 256
    $region37: #{tpu_custom_call.1} parent=1 // pred_fallthru
      _
    // Predicated region
    $region38: #{tpu_custom_call.1} parent=1 // pred_check
      _
    $region39: #{tpu_custom_call.1} parent=1 // pred_check_branch
      %202 = sbr.rel (0) target = $region41
    $region40: #{tpu_custom_call.1} parent=1 // pred_region
      %203 = dma.done [#allocation9], 256
    $region41: #{tpu_custom_call.1} parent=1 // pred_fallthru
      _
    // Predicated region
    $region42: #{tpu_custom_call.1} parent=1 // pred_check
      _
    $region43: #{tpu_custom_call.1} parent=1 // pred_check_branch
      %205 = sbr.rel (0) target = $region45
    $region44: #{tpu_custom_call.1} parent=1 // pred_region
      %206 = dma.done [#allocation9], 256
    $region45: #{tpu_custom_call.1} parent=1 // pred_fallthru
      _
    %207 = vsyncpa [#allocation3], 1
    %208 = vsyncpa [#allocation6], 1
    %209 = vsyncpa [#allocation4], 1
    %210 = vsyncpa [#allocation9], 1

</llo_original>
